<compile_context>
chip_gen: v6e
topology: v6e:2x2x1
jax: 0.10.0
libtpu: 0.0.40
codegen_flags: <defaults>
</compile_context>

<pallas_src>
import jax
import jax.numpy as jnp
from jax.experimental import pallas as pl
from jax.experimental.pallas import tpu as pltpu


def _fact_red_kernel(p0_ref, p1_ref, w0_ref, w1_ref, bias_ref, out_ref):
    # p0_ref / p1_ref : (C_in, TS)       subsampled activations, spatial on lanes
    # w0_ref / w1_ref : (ch_half, C_in)  BN-scale-folded 1x1-conv weights
    # bias_ref        : (2, ch_half, 1)  folded eval-mode BN bias, per path
    # out_ref         : (2, ch_half, TS) path-major tile; flattening (2, ch_half)
    #                   gives the channel-concat order. TS % 128 == 0 -> dense stores.
    h0 = jnp.dot(w0_ref[...], p0_ref[...], preferred_element_type=jnp.float32)
    h1 = jnp.dot(w1_ref[...], p1_ref[...], preferred_element_type=jnp.float32)
    out_ref[0] = (h0 + bias_ref[0]).astype(out_ref.dtype)
    out_ref[1] = (h1 + bias_ref[1]).astype(out_ref.dtype)


def _pick_spatial_tile(S_pad, N, C, ch_half, in_bytes, out_bytes,
                       max_tile=1024, vmem_budget=8 << 20):
    """Largest 128-multiple tile of the (padded) spatial axis that divides S_pad,
    fits a conservative double-buffered VMEM budget (OK for v5e's 16 MiB scoped
    default), and leaves >= 2 grid blocks for megacore sharding when possible."""
    def footprint(ts):
        # 2x for double buffering of the pipelined operands / results + weights.
        return (2 * ts * (2 * C * in_bytes + 2 * ch_half * out_bytes)
                + 2 * (2 * ch_half) * C * 4)

    ts = max(128, (min(max_tile, S_pad) // 128) * 128)
    while ts > 128 and (S_pad % ts != 0 or footprint(ts) > vmem_budget):
        ts -= 128
    # v7x has 2 TensorCores: make sure a 'parallel' axis exposes >= 2 blocks.
    if N * (S_pad // ts) < 2 and ts > 128:
        half = (ts // 2 // 128) * 128
        while half > 128 and S_pad % half != 0:
            half -= 128
        if half >= 128 and S_pad % half == 0:
            ts = half
    return ts


def factorized_reduction(x_nchw, w0, w1, gamma, beta, run_mean, run_var, eps=1e-5):
    """x_nchw: (N, C_in, H, W); w0/w1: (C_in, out_channels//2) 1x1-conv weights."""
    N, C, H, W = x_nchw.shape
    ch_half = w0.shape[1]
    c_out = 2 * ch_half
    dtype = x_nchw.dtype
    in_bytes = jnp.dtype(dtype).itemsize

    Ho, Wo = (H + 1) // 2, (W + 1) // 2
    S = Ho * Wo

    # ---- stride-2 subsample (producers fused into the pallas_call operands via
    #      allow_input_fusion, so p0/p1 are not materialized in HBM) ----
    p0 = x_nchw[:, :, ::2, ::2].reshape(N, C, S)               # AvgPool(1, s=2)
    if H % 2 == 0 and W % 2 == 0:
        # even H/W: shift-then-subsample is exactly x[1::2, 1::2]; no pad copy
        p1 = x_nchw[:, :, 1::2, 1::2].reshape(N, C, S)
    else:
        xs = jnp.pad(x_nchw[:, :, 1:, 1:], ((0, 0), (0, 0), (0, 1), (0, 1)))
        p1 = xs[:, :, ::2, ::2].reshape(N, C, S)

    # ---- lane-dense spatial extent: pad S up to a multiple of 128, crop after ----
    S_pad = ((S + 127) // 128) * 128
    if S_pad != S:
        pad = ((0, 0), (0, 0), (0, S_pad - S))
        p0 = jnp.pad(p0, pad)
        p1 = jnp.pad(p1, pad)

    # ---- fold eval-mode BN: scale into weights, bias stays separate ----
    scale = (gamma.astype(jnp.float32)
             / jnp.sqrt(run_var.astype(jnp.float32) + eps))               # (c_out,)
    bias = (beta.astype(jnp.float32)
            - run_mean.astype(jnp.float32) * scale).reshape(2, ch_half, 1)
    w0_s = (w0.astype(jnp.float32) * scale[:ch_half][None, :]).T          # (ch_half, C)
    w1_s = (w1.astype(jnp.float32) * scale[ch_half:][None, :]).T          # (ch_half, C)
    if dtype == jnp.bfloat16:
        # keep the MXU on its native bf16 path; accumulation stays f32 in-kernel
        w0_s = w0_s.astype(jnp.bfloat16)
        w1_s = w1_s.astype(jnp.bfloat16)

    ts = _pick_spatial_tile(S_pad, N, C, ch_half, in_bytes, in_bytes)
    grid = (N, S_pad // ts)
    n_steps = N * (S_pad // ts)

    # deeper pipelining only pays when there are many small grid steps
    if ts <= 512 and n_steps >= 4:
        p_spec = lambda: pl.BlockSpec((None, C, ts), lambda n, s: (n, 0, s),
                                      pipeline_mode=pl.Buffered(3))
    else:
        p_spec = lambda: pl.BlockSpec((None, C, ts), lambda n, s: (n, 0, s))

    cost = pl.CostEstimate(
        flops=2 * N * c_out * C * S_pad,
        transcendentals=0,
        bytes_accessed=(N * C * H * W * in_bytes            # x read once (fused subsample)
                        + N * c_out * S_pad * in_bytes      # output
                        + 2 * ch_half * C * w0_s.dtype.itemsize
                        + c_out * 4),
    )

    out = pl.pallas_call(
        _fact_red_kernel,
        out_shape=jax.ShapeDtypeStruct((N, 2, ch_half, S_pad), dtype),
        grid_spec=pltpu.PrefetchScalarGridSpec(
            num_scalar_prefetch=0,
            grid=grid,
            in_specs=[
                p_spec(),
                p_spec(),
                pl.BlockSpec((ch_half, C), lambda n, s: (0, 0)),
                pl.BlockSpec((ch_half, C), lambda n, s: (0, 0)),
                pl.BlockSpec((2, ch_half, 1), lambda n, s: (0, 0, 0)),
            ],
            out_specs=pl.BlockSpec((None, 2, ch_half, ts), lambda n, s: (n, 0, 0, s)),
        ),
        compiler_params=pltpu.CompilerParams(
            dimension_semantics=("parallel", "parallel"),
            allow_input_fusion=[True, True, False, False, False],
        ),
        cost_estimate=cost,
    )(p0, p1, w0_s, w1_s, bias)

    # (N, 2, ch_half, S) flattens to NCHW channel-concat order; crop the lane pad.
    return out[:, :, :, :S].reshape(N, c_out, Ho, Wo)


def _reference(x, w0, w1, gamma, beta, run_mean, run_var, eps=1e-5):
    p0 = x[:, :, ::2, ::2]
    xp = jnp.pad(x, ((0, 0), (0, 0), (0, 1), (0, 1)))[:, :, 1:, 1:]
    p1 = xp[:, :, ::2, ::2]
    h0 = jnp.einsum('nchw,cd->ndhw', p0, w0)
    h1 = jnp.einsum('nchw,cd->ndhw', p1, w1)
    h = jnp.concatenate([h0, h1], axis=1)
    scale = gamma / jnp.sqrt(run_var + eps)
    shift = beta - run_mean * scale
    return h * scale[None, :, None, None] + shift[None, :, None, None]


if __name__ == "__main__":
    # module config: input_size = [C_in=4, H=16, W=16], out_channels = 8
    N, C_in, H, W = 2, 4, 16, 16
    out_channels = 8
    ch_half = out_channels // 2

    key = jax.random.PRNGKey(0)
    kx, k0, k1, kg, kb, km, kv = jax.random.split(key, 7)
    x = jax.random.normal(kx, (N, C_in, H, W), jnp.float32)
    # 1x1 conv weights stored as (C_in, out_channels//2) (== PyTorch weight[oc, c, 0, 0].T)
    w0 = jax.random.normal(k0, (C_in, ch_half), jnp.float32) * 0.1
    w1 = jax.random.normal(k1, (C_in, ch_half), jnp.float32) * 0.1
    gamma = jax.random.normal(kg, (out_channels,), jnp.float32) * 0.1 + 1.0
    beta = jax.random.normal(kb, (out_channels,), jnp.float32) * 0.1
    run_mean = jax.random.normal(km, (out_channels,), jnp.float32) * 0.1
    run_var = jax.random.uniform(kv, (out_channels,), jnp.float32, 0.5, 1.5)

    y = factorized_reduction(x, w0, w1, gamma, beta, run_mean, run_var)
    y = jax.block_until_ready(y)

    y_ref = _reference(x, w0, w1, gamma, beta, run_mean, run_var)
    assert y.shape == (N, out_channels, H // 2, W // 2), y.shape
    assert jnp.allclose(y, y_ref, atol=1e-5, rtol=1e-5), "mismatch vs reference"
    print("KERNEL_OK")
</pallas_src>

<mosaic_0001>
module attributes {stable_mosaic.version = 11 : i64} {
  func.func @_fact_red_kernel(%arg0: i32, %arg1: i32, %arg2: memref<1x4x128xf32, #tpu.memory_space<vmem>>, %arg3: memref<1x4x128xf32, #tpu.memory_space<vmem>>, %arg4: memref<4x4xf32, #tpu.memory_space<vmem>>, %arg5: memref<4x4xf32, #tpu.memory_space<vmem>>, %arg6: memref<2x4x1xf32, #tpu.memory_space<vmem>>, %arg7: memref<1x2x4x128xf32, #tpu.memory_space<vmem>>) attributes {dimension_semantics = [#tpu.dimension_semantics<parallel>, #tpu.dimension_semantics<parallel>], iteration_bounds = array<i64: 2, 1>, scalar_prefetch = 0 : i64, scratch_operands = 0 : i64, tpu.core_type = #tpu.core_type<tc>, window_params = [{transform_indices = @transform_0, window_bounds = array<i64: 1, 4, 128>}, {transform_indices = @transform_1, window_bounds = array<i64: 1, 4, 128>}, {pipeline_mode = #tpu.pipeline_mode<synchronous>, transform_indices = @transform_2, window_bounds = array<i64: 4, 4>}, {pipeline_mode = #tpu.pipeline_mode<synchronous>, transform_indices = @transform_3, window_bounds = array<i64: 4, 4>}, {pipeline_mode = #tpu.pipeline_mode<synchronous>, transform_indices = @transform_4, window_bounds = array<i64: 2, 4, 1>}, {transform_indices = @transform_5, window_bounds = array<i64: 1, 2, 4, 128>}]} {
    %c0 = arith.constant 0 : index
    %c0_0 = arith.constant 0 : index
    %0 = vector.load %arg4[%c0, %c0_0] : memref<4x4xf32, #tpu.memory_space<vmem>>, vector<4x4xf32>
    %c0_1 = arith.constant 0 : index
    %c0_2 = arith.constant 0 : index
    %c0_3 = arith.constant 0 : index
    %1 = vector.load %arg2[%c0_1, %c0_2, %c0_3] : memref<1x4x128xf32, #tpu.memory_space<vmem>>, vector<1x4x128xf32>
    %2 = vector.shape_cast %1 : vector<1x4x128xf32> to vector<4x128xf32>
    %cst = arith.constant dense<0.000000e+00> : vector<4x128xf32>
    %3 = tpu.matmul %0, %2, %cst {dimension_numbers = #tpu.dot_dimension_numbers<[1], [0], [0], [1], [0, 0, 1, 1], [], []>} : vector<4x4xf32>, vector<4x128xf32>, vector<4x128xf32> -> vector<4x128xf32>
    %c0_4 = arith.constant 0 : index
    %c0_5 = arith.constant 0 : index
    %4 = vector.load %arg5[%c0_4, %c0_5] : memref<4x4xf32, #tpu.memory_space<vmem>>, vector<4x4xf32>
    %c0_6 = arith.constant 0 : index
    %c0_7 = arith.constant 0 : index
    %c0_8 = arith.constant 0 : index
    %5 = vector.load %arg3[%c0_6, %c0_7, %c0_8] : memref<1x4x128xf32, #tpu.memory_space<vmem>>, vector<1x4x128xf32>
    %6 = vector.shape_cast %5 : vector<1x4x128xf32> to vector<4x128xf32>
    %cst_9 = arith.constant dense<0.000000e+00> : vector<4x128xf32>
    %7 = tpu.matmul %4, %6, %cst_9 {dimension_numbers = #tpu.dot_dimension_numbers<[1], [0], [0], [1], [0, 0, 1, 1], [], []>} : vector<4x4xf32>, vector<4x128xf32>, vector<4x128xf32> -> vector<4x128xf32>
    %c0_10 = arith.constant 0 : index
    %c0_11 = arith.constant 0 : index
    %c0_12 = arith.constant 0 : index
    %8 = vector.load %arg6[%c0_10, %c0_11, %c0_12] : memref<2x4x1xf32, #tpu.memory_space<vmem>>, vector<1x4x1xf32>
    %9 = vector.shape_cast %8 : vector<1x4x1xf32> to vector<4x1xf32>
    %10 = vector.broadcast %9 : vector<4x1xf32> to vector<4x128xf32>
    %11 = arith.addf %3, %10 : vector<4x128xf32>
    %c0_13 = arith.constant 0 : index
    %c0_14 = arith.constant 0 : index
    %c0_15 = arith.constant 0 : index
    %c0_16 = arith.constant 0 : index
    %12 = vector.load %arg7[%c0_13, %c0_14, %c0_15, %c0_16] : memref<1x2x4x128xf32, #tpu.memory_space<vmem>>, vector<1x1x4x128xf32>
    %13 = vector.shape_cast %12 : vector<1x1x4x128xf32> to vector<4x128xf32>
    %14 = vector.shape_cast %11 : vector<4x128xf32> to vector<1x1x4x128xf32>
    tpu.vector_store %arg7[%c0_13, %c0_14, %c0_15, %c0_16], %14 {strides = array<i32>} : memref<1x2x4x128xf32, #tpu.memory_space<vmem>>, vector<1x1x4x128xf32>,
    %c1 = arith.constant 1 : index
    %c0_17 = arith.constant 0 : index
    %c0_18 = arith.constant 0 : index
    %15 = vector.load %arg6[%c1, %c0_17, %c0_18] : memref<2x4x1xf32, #tpu.memory_space<vmem>>, vector<1x4x1xf32>
    %16 = vector.shape_cast %15 : vector<1x4x1xf32> to vector<4x1xf32>
    %17 = vector.broadcast %16 : vector<4x1xf32> to vector<4x128xf32>
    %18 = arith.addf %7, %17 : vector<4x128xf32>
    %c0_19 = arith.constant 0 : index
    %c1_20 = arith.constant 1 : index
    %c0_21 = arith.constant 0 : index
    %c0_22 = arith.constant 0 : index
    %19 = vector.load %arg7[%c0_19, %c1_20, %c0_21, %c0_22] : memref<1x2x4x128xf32, #tpu.memory_space<vmem>>, vector<1x1x4x128xf32>
    %20 = vector.shape_cast %19 : vector<1x1x4x128xf32> to vector<4x128xf32>
    %21 = vector.shape_cast %18 : vector<4x128xf32> to vector<1x1x4x128xf32>
    tpu.vector_store %arg7[%c0_19, %c1_20, %c0_21, %c0_22], %21 {strides = array<i32>} : memref<1x2x4x128xf32, #tpu.memory_space<vmem>>, vector<1x1x4x128xf32>,
    return
  }
  func.func @transform_0(%arg0: i32, %arg1: i32) -> (i32, i32, i32) {
    %c0_i32 = arith.constant 0 : i32
    %c0_i32_0 = arith.constant 0 : i32
    return %arg0, %c0_i32, %arg1 : i32, i32, i32
  }
  func.func @transform_1(%arg0: i32, %arg1: i32) -> (i32, i32, i32) {
    %c0_i32 = arith.constant 0 : i32
    %c0_i32_0 = arith.constant 0 : i32
    return %arg0, %c0_i32, %arg1 : i32, i32, i32
  }
  func.func @transform_2(%arg0: i32, %arg1: i32) -> (i32, i32) {
    %c0_i32 = arith.constant 0 : i32
    %c0_i32_0 = arith.constant 0 : i32
    %c0_i32_1 = arith.constant 0 : i32
    return %c0_i32, %c0_i32_0 : i32, i32
  }
  func.func @transform_3(%arg0: i32, %arg1: i32) -> (i32, i32) {
    %c0_i32 = arith.constant 0 : i32
    %c0_i32_0 = arith.constant 0 : i32
    %c0_i32_1 = arith.constant 0 : i32
    return %c0_i32, %c0_i32_0 : i32, i32
  }
  func.func @transform_4(%arg0: i32, %arg1: i32) -> (i32, i32, i32) {
    %c0_i32 = arith.constant 0 : i32
    %c0_i32_0 = arith.constant 0 : i32
    %c0_i32_1 = arith.constant 0 : i32
    %c0_i32_2 = arith.constant 0 : i32
    return %c0_i32, %c0_i32_0, %c0_i32_1 : i32, i32, i32
  }
  func.func @transform_5(%arg0: i32, %arg1: i32) -> (i32, i32, i32, i32) {
    %c0_i32 = arith.constant 0 : i32
    %c0_i32_0 = arith.constant 0 : i32
    %c0_i32_1 = arith.constant 0 : i32
    return %arg0, %c0_i32, %c0_i32_0, %arg1 : i32, i32, i32, i32
  }
}

</mosaic_0001>

<llo_original>
// kernel: tpu_custom_call.1
$region0: #{tpu_custom_call.1}
  #allocation0 [shape = 'u32[]', space=smem, size = 0x4, offset = 0x4, fixed_abs, tag = 'smem constant byte address 0x4 - core index']
  #allocation1 [shape = 'u32[144,128]{1,0:T(1,128)}', space=vmem, size = 0x12000, scoped, tag = 'internal scratch']
  %s0 = inlined_call_operand.vmem [shape: f32[2,4,128], index: 0, kind: input, shape index: {}]
  %s1 = inlined_call_operand.hbm [shape: f32[2,4,128], index: 1, kind: input, shape index: {}]
  %s2 = inlined_call_operand.vmem [shape: f32[4,4], index: 2, kind: input, shape index: {}]
  %s3 = inlined_call_operand.hbm [shape: f32[4,4], index: 3, kind: input, shape index: {}]
  %s4 = inlined_call_operand.vmem [shape: f32[2,4,1], index: 4, kind: input, shape index: {}]
  %s5 = inlined_call_operand.hbm [shape: f32[2,2,4,128], index: 5, kind: output, shape index: {}]
  %s6 = sld [smem:[#allocation0]]
  $region61: #{tpu_custom_call.1} parent=0
    _
  %s8 = ssub.s32 1, %s6
  %s9 = scalar_select 0, %s8, %s6
  $region1: #{tpu_custom_call.1} parent=0
    #allocation2 [shape = 'u8[4096]{0}', space=vmem, size = 0x1000, scoped, tag = 'input window, operand 1']
    #allocation3 [shape = 's32[2]{0}', space=sflag, size = 0x8, scoped, tag = 'scoped memory for tpu_custom_call.1']
    #allocation4 [shape = 's32[2]{0}', space=sflag, size = 0x8, scoped, tag = 'scoped memory for tpu_custom_call.1']
    #allocation5 [shape = 'u8[2048]{0}', space=vmem, size = 0x800, scoped, tag = 'input window, operand 3, single buffered']
    #allocation6 [shape = 's32[1]{0}', space=sflag, size = 0x4, scoped, tag = 'scoped memory for tpu_custom_call.1']
    #allocation7 [shape = 'u8[8192]{0}', space=vmem, size = 0x2000, scoped, tag = 'output window, operand 0']
    %10 = vsyncpa [#allocation3], 0
    %s11 = scalar_lea.sflag [#allocation3], 1
    %12 = vsyncpa %s11, 0
    %13 = vsyncpa [#allocation6], 0
    %14 = vsyncpa [#allocation4], 0
    %s15 = scalar_lea.sflag [#allocation4], 1
    %16 = vsyncpa %s15, 0
    loop: start=0, step=1, limit=4
    $region2: #{tpu_custom_call.1} parent=1 // loop_pre_header
      _
    $region3: #{tpu_custom_call.1} parent=1 // loop_header
      %s18 = sphi 0, %s22
      %p19 = scmp.ge.s32.totalorder %s18, 4
      %s25 = sphi 0, %s37
      %s26 = sphi 0, %s33
      %s27 = sphi 0, %s25
      %s28 = sphi 0, %s26
      %s29 = sphi 0, %s27
      %s30 = sphi 0, %s28
      %s42 = sphi 0, %s44
      %s45 = sphi 0, %s42
      %s46 = sphi 0, %s45
      %s62 = sphi 0, %s46
      %s70 = sphi 0, %s72
      %s73 = sphi 0, %s70
      %s74 = sphi 0, %s73
      %s90 = sphi 0, %s74
      %s94 = sphi 0, %s94
      %s96 = sphi 0, %s94
      %s97 = sphi 0, %s96
      %s111 = sphi 0, %s97
      %s115 = sphi 0, %s115
      %s117 = sphi 0, %s115
      %s118 = sphi 0, %s117
      %s132 = sphi 0, %s118
      %s136 = sphi 0, %s136
      %s138 = sphi 0, %s136
      %s139 = sphi 0, %s138
      %s153 = sphi 0, %s139
      %s161 = sphi 0, %s163
      %s164 = sphi 0, %s161
      %s165 = sphi 0, %s164
      %s181 = sphi 0, %s165
    $region4: #{tpu_custom_call.1} parent=1 // loop_header_branch
      %21 = sbr.rel (%p19) target = $region8
    $region5: #{tpu_custom_call.1} parent=1 // loop_body
      %s23 = ssub.s32 %s18, 1
      %s24 = ssub.s32 %s18, 2
      %s31 = sadd.s32 1, %s26
      %p32 = scmp.ge.s32.totalorder %s31, 1
      %s33 = scalar_select %p32, 0, %s31
      %s34 = sadd.s32 1, %s25
      %s35 = scalar_select %p32, %s34, %s25
      %p36 = scmp.ge.s32.totalorder %s35, 2
      %s37 = scalar_select %p36, 0, %s35
      %s38 = ssub.s32 %s25, %s37
      %s39 = ssub.s32 %s26, %s33
      %s40 = sor.u32 %s38, %s39
      %p41 = scmp.eq.s32.totalorder %s40, 0
      %s43 = sadd.s32 %s42, 1
      %s44 = scalar_select %p41, %s42, %s43
      %p47 = pneg %p41
      %p48 = scmp.eq.s32.totalorder %s18, 1
      %p49 = por %p47, %p48
      %p50 = scmp.ne.s32.totalorder %s42, %s45
      %p51 = scmp.eq.s32.totalorder %s18, 0
      %p52 = por %p50, %p51
      %p53 = scmp.ne.s32.totalorder %s42, %s45
      %p54 = scmp.eq.s32.totalorder %s23, 1
      %p55 = por %p53, %p54
      %p56 = scmp.ne.s32.totalorder %s45, %s46
      %p57 = scmp.eq.s32.totalorder %s23, 0
      %p58 = por %p56, %p57
      %p59 = scmp.ne.s32.totalorder %s45, %s46
      %p60 = scmp.eq.s32.totalorder %s24, 1
      %p61 = por %p59, %p60
      %p63 = scmp.ne.s32.totalorder %s46, %s62
      %p64 = scmp.eq.s32.totalorder %s24, 0
      %p65 = por %p63, %p64
      %s66 = ssub.s32 %s25, %s37
      %s67 = ssub.s32 %s26, %s33
      %s68 = sor.u32 %s66, %s67
      %p69 = scmp.eq.s32.totalorder %s68, 0
      %s71 = sadd.s32 %s70, 1
      %s72 = scalar_select %p69, %s70, %s71
      %p75 = pneg %p69
      %p76 = scmp.eq.s32.totalorder %s18, 1
      %p77 = por %p75, %p76
      %p78 = scmp.ne.s32.totalorder %s70, %s73
      %p79 = scmp.eq.s32.totalorder %s18, 0
      %p80 = por %p78, %p79
      %p81 = scmp.ne.s32.totalorder %s70, %s73
      %p82 = scmp.eq.s32.totalorder %s23, 1
      %p83 = por %p81, %p82
      %p84 = scmp.ne.s32.totalorder %s73, %s74
      %p85 = scmp.eq.s32.totalorder %s23, 0
      %p86 = por %p84, %p85
      %p87 = scmp.ne.s32.totalorder %s73, %s74
      %p88 = scmp.eq.s32.totalorder %s24, 1
      %p89 = por %p87, %p88
      %p91 = scmp.ne.s32.totalorder %s74, %s90
      %p92 = scmp.eq.s32.totalorder %s24, 0
      %p93 = por %p91, %p92
      %s95 = sadd.s32 %s94, 1
      %p98 = scmp.eq.s32.totalorder %s18, 1
      %p99 = scmp.ne.s32.totalorder %s94, %s96
      %p100 = scmp.eq.s32.totalorder %s18, 0
      %p101 = por %p99, %p100
      %p102 = scmp.ne.s32.totalorder %s94, %s96
      %p103 = scmp.eq.s32.totalorder %s23, 1
      %p104 = por %p102, %p103
      %p105 = scmp.ne.s32.totalorder %s96, %s97
      %p106 = scmp.eq.s32.totalorder %s23, 0
      %p107 = por %p105, %p106
      %p108 = scmp.ne.s32.totalorder %s96, %s97
      %p109 = scmp.eq.s32.totalorder %s24, 1
      %p110 = por %p108, %p109
      %p112 = scmp.ne.s32.totalorder %s97, %s111
      %p113 = scmp.eq.s32.totalorder %s24, 0
      %p114 = por %p112, %p113
      %s116 = sadd.s32 %s115, 1
      %p119 = scmp.eq.s32.totalorder %s18, 1
      %p120 = scmp.ne.s32.totalorder %s115, %s117
      %p121 = scmp.eq.s32.totalorder %s18, 0
      %p122 = por %p120, %p121
      %p123 = scmp.ne.s32.totalorder %s115, %s117
      %p124 = scmp.eq.s32.totalorder %s23, 1
      %p125 = por %p123, %p124
      %p126 = scmp.ne.s32.totalorder %s117, %s118
      %p127 = scmp.eq.s32.totalorder %s23, 0
      %p128 = por %p126, %p127
      %p129 = scmp.ne.s32.totalorder %s117, %s118
      %p130 = scmp.eq.s32.totalorder %s24, 1
      %p131 = por %p129, %p130
      %p133 = scmp.ne.s32.totalorder %s118, %s132
      %p134 = scmp.eq.s32.totalorder %s24, 0
      %p135 = por %p133, %p134
      %s137 = sadd.s32 %s136, 1
      %p140 = scmp.eq.s32.totalorder %s18, 1
      %p141 = scmp.ne.s32.totalorder %s136, %s138
      %p142 = scmp.eq.s32.totalorder %s18, 0
      %p143 = por %p141, %p142
      %p144 = scmp.ne.s32.totalorder %s136, %s138
      %p145 = scmp.eq.s32.totalorder %s23, 1
      %p146 = por %p144, %p145
      %p147 = scmp.ne.s32.totalorder %s138, %s139
      %p148 = scmp.eq.s32.totalorder %s23, 0
      %p149 = por %p147, %p148
      %p150 = scmp.ne.s32.totalorder %s138, %s139
      %p151 = scmp.eq.s32.totalorder %s24, 1
      %p152 = por %p150, %p151
      %p154 = scmp.ne.s32.totalorder %s139, %s153
      %p155 = scmp.eq.s32.totalorder %s24, 0
      %p156 = por %p154, %p155
      %s157 = ssub.s32 %s25, %s37
      %s158 = ssub.s32 %s26, %s33
      %s159 = sor.u32 %s157, %s158
      %p160 = scmp.eq.s32.totalorder %s159, 0
      %s162 = sadd.s32 %s161, 1
      %s163 = scalar_select %p160, %s161, %s162
      %p166 = pneg %p160
      %p167 = scmp.eq.s32.totalorder %s18, 1
      %p168 = por %p166, %p167
      %p169 = scmp.ne.s32.totalorder %s161, %s164
      %p170 = scmp.eq.s32.totalorder %s18, 0
      %p171 = por %p169, %p170
      %p172 = scmp.ne.s32.totalorder %s161, %s164
      %p173 = scmp.eq.s32.totalorder %s23, 1
      %p174 = por %p172, %p173
      %p175 = scmp.ne.s32.totalorder %s164, %s165
      %p176 = scmp.eq.s32.totalorder %s23, 0
      %p177 = por %p175, %p176
      %p178 = scmp.ne.s32.totalorder %s164, %s165
      %p179 = scmp.eq.s32.totalorder %s24, 1
      %p180 = por %p178, %p179
      %p182 = scmp.ne.s32.totalorder %s165, %s181
      %p183 = scmp.eq.s32.totalorder %s24, 0
      %p184 = por %p182, %p183
      %p185 = scmp.le.s32.totalorder 1, %s18
      %p186 = scmp.lt.s32.totalorder %s18, 3
      %p187 = pnand %p185, %p186
      %p188 = pneg %p187
      // Predicated region
      $region9: #{tpu_custom_call.1} parent=5 // pred_check
        _
      $region10: #{tpu_custom_call.1} parent=5 // pred_check_branch
        %190 = sbr.rel (%p187) target = $region12
      $region11: #{tpu_custom_call.1} parent=5 // pred_region
        %s191 = ssub.s32 %s18, 1
        // Predicated region
        $region13: #{tpu_custom_call.1} parent=11 // pred_check
          %p192 = pneg %p107
        $region14: #{tpu_custom_call.1} parent=11 // pred_check_branch
          %194 = sbr.rel (%p192) target = $region16
        $region15: #{tpu_custom_call.1} parent=11 // pred_region
          _
        $region16: #{tpu_custom_call.1} parent=11 // pred_fallthru
          _
        // Predicated region
        $region17: #{tpu_custom_call.1} parent=11 // pred_check
          %p195 = pneg %p128
        $region18: #{tpu_custom_call.1} parent=11 // pred_check_branch
          %197 = sbr.rel (%p195) target = $region20
        $region19: #{tpu_custom_call.1} parent=11 // pred_region
          %s199 = ssub.s32 64, 64
          %200 = vsyncadd [#allocation6], %s199
          %s202 = sshll.u32 [#allocation5], 4
          %s203 = int_to_ptr.vmem [resolvable:$true] %s202
          %205 = dma.hbm_to_vmem [thread:$0]  %s3, 64, %s203, [#allocation6]
        $region20: #{tpu_custom_call.1} parent=11 // pred_fallthru
          _
        // Predicated region
        $region21: #{tpu_custom_call.1} parent=11 // pred_check
          %p206 = pneg %p149
        $region22: #{tpu_custom_call.1} parent=11 // pred_check_branch
          %208 = sbr.rel (%p206) target = $region24
        $region23: #{tpu_custom_call.1} parent=11 // pred_region
          _
        $region24: #{tpu_custom_call.1} parent=11 // pred_fallthru
          _
      $region12: #{tpu_custom_call.1} parent=5 // pred_fallthru
        _
      %p209 = scmp.lt.s32.totalorder %s18, 2
      // Predicated region
      $region25: #{tpu_custom_call.1} parent=5 // pred_check
        %p210 = pneg %p209
      $region26: #{tpu_custom_call.1} parent=5 // pred_check_branch
        %212 = sbr.rel (%p210) target = $region28
      $region27: #{tpu_custom_call.1} parent=5 // pred_region
        // Predicated region
        $region29: #{tpu_custom_call.1} parent=27 // pred_check
          %p213 = pneg %p52
        $region30: #{tpu_custom_call.1} parent=27 // pred_check_branch
          %215 = sbr.rel (%p213) target = $region32
        $region31: #{tpu_custom_call.1} parent=27 // pred_region
          %p216 = scmp.lt.s32.totalorder %s25, 1
          %s217 = scalar_select %p216, %s25, 1
          %p218 = scmp.lt.s32.totalorder %s26, 0
          %s219 = scalar_select %p218, %s26, 0
          %s220 = sadd.s32 %s219, %s217
          %s221 = smul.addr %s220, 4
          %s222 = scalar_lea.vmem %s0, %s221
        $region32: #{tpu_custom_call.1} parent=27 // pred_fallthru
          _
        // Predicated region
        $region33: #{tpu_custom_call.1} parent=27 // pred_check
          %p223 = pneg %p80
        $region34: #{tpu_custom_call.1} parent=27 // pred_check_branch
          %225 = sbr.rel (%p223) target = $region36
        $region35: #{tpu_custom_call.1} parent=27 // pred_region
          %s226 = sand.u32 %s70, 1
          %s227 = scalar_lea.sflag [#allocation3], %s226
          %s228 = sand.u32 %s70, 1
          %s229 = smul.addr %s228, 4
          %s230 = scalar_lea.vmem [#allocation2], %s229
          %s232 = ssub.s32 64, 64
          %233 = vsyncadd %s227, %s232
          %s234 = sadd.s32 %s26, %s25
          %s235 = smul.addr %s234, 64
          %s236 = scalar_lea.hbm %s1, %s235
          %s238 = sshll.u32 %s230, 4
          %s239 = int_to_ptr.vmem [resolvable:$true] %s238
          %241 = dma.hbm_to_vmem [thread:$0]  %s236, 64, %s239, %s227
        $region36: #{tpu_custom_call.1} parent=27 // pred_fallthru
          _
      $region28: #{tpu_custom_call.1} parent=5 // pred_fallthru
        _
      %p242 = scmp.le.s32.totalorder 1, %s18
      %p243 = scmp.lt.s32.totalorder %s18, 3
      %p244 = pnand %p242, %p243
      %p245 = pneg %p244
      // Predicated region
      $region37: #{tpu_custom_call.1} parent=5 // pred_check
        _
      $region38: #{tpu_custom_call.1} parent=5 // pred_check_branch
        %247 = sbr.rel (%p244) target = $region40
      $region39: #{tpu_custom_call.1} parent=5 // pred_region
        %s248 = ssub.s32 %s18, 1
        %s249 = sand.u32 %s73, 1
        %s250 = scalar_lea.sflag [#allocation3], %s249
        %s251 = sand.u32 %s73, 1
        %s252 = smul.addr %s251, 4
        %s253 = scalar_lea.vmem [#allocation2], %s252
        // Predicated region
        $region41: #{tpu_custom_call.1} parent=39 // pred_check
          %p254 = pneg %p86
        $region42: #{tpu_custom_call.1} parent=39 // pred_check_branch
          %256 = sbr.rel (%p254) target = $region44
        $region43: #{tpu_custom_call.1} parent=39 // pred_region
          %257 = dma.done %s250, 64
        $region44: #{tpu_custom_call.1} parent=39 // pred_fallthru
          _
        // Predicated region
        $region45: #{tpu_custom_call.1} parent=39 // pred_check
          %p258 = pneg %p128
        $region46: #{tpu_custom_call.1} parent=39 // pred_check_branch
          %260 = sbr.rel (%p258) target = $region48
        $region47: #{tpu_custom_call.1} parent=39 // pred_region
          %261 = dma.done [#allocation6], 64
        $region48: #{tpu_custom_call.1} parent=39 // pred_fallthru
          _
        %p262 = scmp.lt.s32.totalorder %s27, 1
        %s263 = scalar_select %p262, %s27, 1
        %p264 = scmp.lt.s32.totalorder %s28, 0
        %s265 = scalar_select %p264, %s28, 0
        %s266 = sadd.s32 %s265, %s263
        %s267 = smul.addr %s266, 4
        %s268 = scalar_lea.vmem %s0, %s267
        %p269 = pneg %p58
        %p270 = pneg %p55
        %s271 = sand.u32 %s73, 1
        %s272 = scalar_lea.sflag [#allocation3], %s271
        %s273 = sand.u32 %s73, 1
        %s274 = smul.addr %s273, 4
        %s275 = scalar_lea.vmem [#allocation2], %s274
        %p276 = pneg %p86
        %p277 = pneg %p83
        %p278 = pneg %p107
        %p279 = pneg %p104
        %p280 = pneg %p128
        %p281 = pneg %p125
        %p282 = pneg %p149
        %p283 = pneg %p146
        %p284 = pneg %p177
        %p285 = pneg %p174
        %s286 = sand.u32 %s164, 1
        %s287 = scalar_lea.sflag [#allocation4], %s286
        %s288 = sand.u32 %s164, 1
        %s289 = smul.addr %s288, 8
        %s290 = scalar_lea.vmem [#allocation7], %s289
        %p291 = scmp.lt.s32.totalorder %s27, 1
        %s292 = scalar_select %p291, %s27, 1
        %p293 = scmp.lt.s32.totalorder %s28, 0
        %s294 = scalar_select %p293, %s28, 0
        %s295 = sadd.s32 %s294, %s292
        %s296 = smul.addr %s295, 4
        %s297 = scalar_lea.vmem %s0, %s296
        %v298 = vld [vmem:[%s2] sm:$0xf]
        %v299 = vld [vmem:[%s297] sm:$0xf]
        %v300 = vld [vmem:[#allocation5] sm:$0xf]
        %v301 = vld [vmem:[%s253] sm:$0xf]
        %v302 = vld [vmem:[%s4] sm:$0xf]
        %304 = vset.pattern.permute.xlu0 0
        %305 = vperm.xlu0 %304, %v302
        %v306 = vpop.permute.xlu0 %305
        %vm308 = vcmask 31744
        %v310 = vsel %vm308, %v298, 0
        %vm312 = vcmask 1043456
        %v314 = vsel %vm312, %v299, 0
        %316 = vmatprep.subr.mxu0 0.0
        %317 = vmatpush1.msra.mxu0 0.0
        %318 = vmatprep.subr.mxu0 0.0
        %319 = vmatpush1.msra.mxu0 0.0
        %320 = vmatprep.subr.mxu0 0.0
        %321 = vmatpush1.msra.mxu0 0.0
        %322 = vmatprep.subr.mxu0 0.0
        %323 = vmatpush1.msra.mxu0 0.0
        %324 = vmatprep.subr.mxu0 0.0
        %325 = vmatpush1.msra.mxu0 0.0
        %326 = vmatprep.subr.mxu0 0.0
        %327 = vmatpush1.msra.mxu0 0.0
        %328 = vmatprep.subr.mxu0 0.0
        %329 = vmatpush1.msra.mxu0 0.0
        %330 = vmatprep.subr.mxu0 0.0
        %331 = vmatpush1.msra.mxu0 0.0
        %332 = vmatprep.subr.mxu0 0.0
        %333 = vmatpush1.msra.mxu0 0.0
        %334 = vmatprep.subr.mxu0 0.0
        %335 = vmatpush1.msra.mxu0 0.0
        %336 = vmatprep.subr.mxu0 0.0
        %337 = vmatpush1.msra.mxu0 0.0
        %338 = vmatprep.subr.mxu0 0.0
        %339 = vmatpush1.msra.mxu0 0.0
        %340 = vmatprep.subr.mxu0 0.0
        %341 = vmatpush1.msra.mxu0 0.0
        %342 = vmatprep.subr.mxu0 0.0
        %343 = vmatpush1.msra.mxu0 0.0
        %344 = vmatprep.subr.mxu0 0.0
        %345 = vmatpush1.msra.mxu0 0.0
        %346 = vmatprep.subr.mxu0 0.0
        %347 = vmatpush1.msra.mxu0 %v314
        %348 = vmatprep.subr.mxu0 0.0
        %349 = vmatpush2.msra.mxu0 0.0
        %350 = vmatprep.subr.mxu0 0.0
        %351 = vmatpush2.msra.mxu0 0.0
        %352 = vmatprep.subr.mxu0 0.0
        %353 = vmatpush2.msra.mxu0 0.0
        %354 = vmatprep.subr.mxu0 0.0
        %355 = vmatpush2.msra.mxu0 0.0
        %356 = vmatprep.subr.mxu0 0.0
        %357 = vmatpush2.msra.mxu0 0.0
        %358 = vmatprep.subr.mxu0 0.0
        %359 = vmatpush2.msra.mxu0 0.0
        %360 = vmatprep.subr.mxu0 0.0
        %361 = vmatpush2.msra.mxu0 0.0
        %362 = vmatprep.subr.mxu0 0.0
        %363 = vmatpush2.msra.mxu0 0.0
        %364 = vmatprep.subr.mxu0 0.0
        %365 = vmatpush2.msra.mxu0 0.0
        %366 = vmatprep.subr.mxu0 0.0
        %367 = vmatpush2.msra.mxu0 0.0
        %368 = vmatprep.subr.mxu0 0.0
        %369 = vmatpush2.msra.mxu0 0.0
        %370 = vmatprep.subr.mxu0 0.0
        %371 = vmatpush2.msra.mxu0 0.0
        %372 = vmatprep.subr.mxu0 0.0
        %373 = vmatpush2.msra.mxu0 0.0
        %374 = vmatprep.subr.mxu0 0.0
        %375 = vmatpush2.msra.mxu0 0.0
        %376 = vmatprep.subr.mxu0 0.0
        %377 = vmatpush2.msra.mxu0 0.0
        %378 = vmatprep.subr.mxu0 0.0
        %379 = vmatpush2.msra.mxu0 0.0
        %380 = vmatprep.mubr.f32.mxu0 0.0
        %381 = vmatmul.mubr.f32.gmra.mxu0 %v310
        %v382 = vpop.f32.mrf.mxu0
        %v383 = vadd.f32 %v306, %v382
        %v384 = vpop.f32.mrf.mxu0
        %385 = vdwg.mxu0
        %386 = vst [vmem:[%s290] sm:$0xf] %v383
        %s387 = scalar_lea.vmem %s4, 4
        %v388 = vld [vmem:[%s387] sm:$0xf]
        %390 = vset.pattern.permute.xlu0 0
        %391 = vperm.xlu0 %390, %v388
        %v392 = vpop.permute.xlu0 %391
        %v395 = vsel %vm308, %v300, 0
        %v398 = vsel %vm312, %v301, 0
        %400 = vmatprep.subr.mxu0 0.0
        %401 = vmatpush1.msra.mxu0 0.0
        %402 = vmatprep.subr.mxu0 0.0
        %403 = vmatpush1.msra.mxu0 0.0
        %404 = vmatprep.subr.mxu0 0.0
        %405 = vmatpush1.msra.mxu0 0.0
        %406 = vmatprep.subr.mxu0 0.0
        %407 = vmatpush1.msra.mxu0 0.0
        %408 = vmatprep.subr.mxu0 0.0
        %409 = vmatpush1.msra.mxu0 0.0
        %410 = vmatprep.subr.mxu0 0.0
        %411 = vmatpush1.msra.mxu0 0.0
        %412 = vmatprep.subr.mxu0 0.0
        %413 = vmatpush1.msra.mxu0 0.0
        %414 = vmatprep.subr.mxu0 0.0
        %415 = vmatpush1.msra.mxu0 0.0
        %416 = vmatprep.subr.mxu0 0.0
        %417 = vmatpush1.msra.mxu0 0.0
        %418 = vmatprep.subr.mxu0 0.0
        %419 = vmatpush1.msra.mxu0 0.0
        %420 = vmatprep.subr.mxu0 0.0
        %421 = vmatpush1.msra.mxu0 0.0
        %422 = vmatprep.subr.mxu0 0.0
        %423 = vmatpush1.msra.mxu0 0.0
        %424 = vmatprep.subr.mxu0 0.0
        %425 = vmatpush1.msra.mxu0 0.0
        %426 = vmatprep.subr.mxu0 0.0
        %427 = vmatpush1.msra.mxu0 0.0
        %428 = vmatprep.subr.mxu0 0.0
        %429 = vmatpush1.msra.mxu0 0.0
        %430 = vmatprep.subr.mxu0 0.0
        %431 = vmatpush1.msra.mxu0 %v398
        %432 = vmatprep.subr.mxu0 0.0
        %433 = vmatpush2.msra.mxu0 0.0
        %434 = vmatprep.subr.mxu0 0.0
        %435 = vmatpush2.msra.mxu0 0.0
        %436 = vmatprep.subr.mxu0 0.0
        %437 = vmatpush2.msra.mxu0 0.0
        %438 = vmatprep.subr.mxu0 0.0
        %439 = vmatpush2.msra.mxu0 0.0
        %440 = vmatprep.subr.mxu0 0.0
        %441 = vmatpush2.msra.mxu0 0.0
        %442 = vmatprep.subr.mxu0 0.0
        %443 = vmatpush2.msra.mxu0 0.0
        %444 = vmatprep.subr.mxu0 0.0
        %445 = vmatpush2.msra.mxu0 0.0
        %446 = vmatprep.subr.mxu0 0.0
        %447 = vmatpush2.msra.mxu0 0.0
        %448 = vmatprep.subr.mxu0 0.0
        %449 = vmatpush2.msra.mxu0 0.0
        %450 = vmatprep.subr.mxu0 0.0
        %451 = vmatpush2.msra.mxu0 0.0
        %452 = vmatprep.subr.mxu0 0.0
        %453 = vmatpush2.msra.mxu0 0.0
        %454 = vmatprep.subr.mxu0 0.0
        %455 = vmatpush2.msra.mxu0 0.0
        %456 = vmatprep.subr.mxu0 0.0
        %457 = vmatpush2.msra.mxu0 0.0
        %458 = vmatprep.subr.mxu0 0.0
        %459 = vmatpush2.msra.mxu0 0.0
        %460 = vmatprep.subr.mxu0 0.0
        %461 = vmatpush2.msra.mxu0 0.0
        %462 = vmatprep.subr.mxu0 0.0
        %463 = vmatpush2.msra.mxu0 0.0
        %464 = vmatprep.mubr.f32.mxu0 0.0
        %465 = vmatmul.mubr.f32.gmra.mxu0 %v395
        %v466 = vpop.f32.mrf.mxu0
        %v467 = vadd.f32 %v392, %v466
        %v468 = vpop.f32.mrf.mxu0
        %469 = vdwg.mxu0
        %s470 = scalar_lea.vmem %s290, 4 [#allocation7]
        %471 = vst [vmem:[%s470] sm:$0xf] %v467
        %s472 = sand.u32 %s164, 1
        %s473 = scalar_lea.sflag [#allocation4], %s472
        %s474 = sand.u32 %s164, 1
        %s475 = smul.addr %s474, 8
        %s476 = scalar_lea.vmem [#allocation7], %s475
        // Predicated region
        $region49: #{tpu_custom_call.1} parent=39 // pred_check
          %p477 = pneg %p174
        $region50: #{tpu_custom_call.1} parent=39 // pred_check_branch
          %479 = sbr.rel (%p477) target = $region52
        $region51: #{tpu_custom_call.1} parent=39 // pred_region
          %s481 = ssub.s32 128, 128
          %482 = vsyncadd %s473, %s481
          %s483 = smul.addr %s27, 2
          %s484 = sadd.s32 %s28, %s483
          %s485 = smul.addr %s484, 64
          %s486 = scalar_lea.hbm %s5, %s485
          %s487 = sshll.u32 %s476, 4
          %s488 = int_to_ptr.vmem [resolvable:$true] %s487
          %493 = dma.vmem_to_hbm [thread:$0]  %s488, 128, %s486, %s473, 64, 64, 4
        $region52: #{tpu_custom_call.1} parent=39 // pred_fallthru
          _
      $region40: #{tpu_custom_call.1} parent=5 // pred_fallthru
        _
      %p494 = scmp.le.s32.totalorder 2, %s18
      // Predicated region
      $region53: #{tpu_custom_call.1} parent=5 // pred_check
        %p495 = pneg %p494
      $region54: #{tpu_custom_call.1} parent=5 // pred_check_branch
        %497 = sbr.rel (%p495) target = $region56
      $region55: #{tpu_custom_call.1} parent=5 // pred_region
        %s498 = ssub.s32 %s18, 2
        // Predicated region
        $region57: #{tpu_custom_call.1} parent=55 // pred_check
          %p499 = pneg %p180
        $region58: #{tpu_custom_call.1} parent=55 // pred_check_branch
          %501 = sbr.rel (%p499) target = $region60
        $region59: #{tpu_custom_call.1} parent=55 // pred_region
          %s502 = sand.u32 %s165, 1
          %s503 = scalar_lea.sflag [#allocation4], %s502
          %s504 = sand.u32 %s165, 1
          %s505 = smul.addr %s504, 8
          %s506 = scalar_lea.vmem [#allocation7], %s505
          %507 = dma.done %s503, 128
        $region60: #{tpu_custom_call.1} parent=55 // pred_fallthru
          _
      $region56: #{tpu_custom_call.1} parent=5 // pred_fallthru
        _
    $region6: #{tpu_custom_call.1} parent=1 // loop_footer
      %s22 = sadd.s32 1, %s18
    $region7: #{tpu_custom_call.1} parent=1 // loop_footer_branch
      %17 = sbr.rel target = $region3
    $region8: #{tpu_custom_call.1} parent=1 // loop_exit
      _
    %508 = vsyncpa [#allocation3], 1
    %s509 = scalar_lea.sflag [#allocation3], 1
    %510 = vsyncpa %s509, 1
    %511 = vsyncpa [#allocation6], 1
    %512 = vsyncpa [#allocation4], 1
    %s513 = scalar_lea.sflag [#allocation4], 1
    %514 = vsyncpa %s513, 1

</llo_original>
